<compile_context>
chip_gen: v5e
topology: v5e:2x2
jax: 0.10.0
libtpu: 0.0.40
codegen_flags: <defaults>
</compile_context>

<pallas_src>
import functools
import math

import jax
import jax.numpy as jnp
import numpy as np
from jax.experimental import pallas as pl
from jax.experimental.pallas import tpu as pltpu

LOG_2PI = math.log(2.0 * math.pi)
LANES = 128  # lane width of every kernel operand / the packed output slab


def natpe_pack_params(w1, b1, w2, b2, prior_alpha):
    """One-time host-side packing of all member parameters into lane-dense slabs.

    Hoisted out of the forward so it runs once when weights change, not per call.
    Returns (w1_slab [Din,128], param_slab [264,128], (K, H, C)).
    """
    K, Din, H = w1.shape
    C = w2.shape[2]
    # TODO(synk): generalize the packing to K*H > 128 (multi-tile lane slabs).
    assert K * H <= LANES and K * C + K <= LANES and C + 1 <= LANES

    w1 = np.asarray(w1, np.float32)
    b1 = np.asarray(b1, np.float32)
    w2 = np.asarray(w2, np.float32)
    b2 = np.asarray(b2, np.float32)
    prior_alpha = np.asarray(prior_alpha, np.float32)

    # Encoder slab: member k occupies lanes [k*H,(k+1)*H); pad lanes stay zero
    # so the padded latents come out as tanh(0) = 0 and never contribute.
    w1p = np.zeros((Din, LANES), np.float32)
    w1p[:, :K * H] = np.transpose(w1, (1, 0, 2)).reshape(Din, K * H)
    b1p = np.zeros((LANES,), np.float32)
    b1p[:K * H] = np.transpose(b1, (1, 0, 2)).reshape(K * H)

    # Head slab [2*128, 128], consumed by ONE MXU push against [z | z*z]:
    #   rows [0,128)   : block-diagonal W2 -> per-member logits in lanes [0, K*C)
    #   rows [128,256) : -0.5 * selector   -> per-member flow log-prob in lanes [K*C, K*C+K)
    whead = np.zeros((2 * LANES, LANES), np.float32)
    bhead = np.zeros((LANES,), np.float32)
    for k in range(K):
        whead[k * H:(k + 1) * H, k * C:(k + 1) * C] = w2[k]
        whead[LANES + k * H:LANES + (k + 1) * H, K * C + k] = -0.5
    bhead[:K * C] = b2.reshape(K * C)
    bhead[K * C:K * C + K] = -0.5 * H * LOG_2PI  # standard-normal flow constant

    alpha0 = np.zeros((LANES,), np.float32)
    alpha0[:C] = prior_alpha.reshape(C)

    # One parameter slab -> one lane-dense input DMA for all small parameters.
    rows = 2 * LANES + 3
    prows = ((rows + 7) // 8) * 8
    params = np.zeros((prows, LANES), np.float32)
    params[:2 * LANES] = whead
    params[2 * LANES + 0] = b1p
    params[2 * LANES + 1] = bhead
    params[2 * LANES + 2] = alpha0
    return jnp.asarray(w1p), jnp.asarray(params), (K, H, C)


def _natpe_kernel(x_ref, w1_ref, p_ref, out_ref, *, K, H, C):
    tb = x_ref.shape[0]
    r_b1 = 2 * LANES        # row holding the packed encoder bias
    r_bh = 2 * LANES + 1    # row holding packed head bias + flow constant
    r_a0 = 2 * LANES + 2    # row holding the Dirichlet prior concentration
    kc = K * C
    log_k = math.log(K)
    log_budget = 0.5 * H * math.log(4.0 * math.pi)  # NatPN "normal" certainty budget

    # MXU push 1: all K member encoders at once (member k -> lanes [k*H,(k+1)*H)).
    z = jnp.tanh(
        jnp.dot(x_ref[...], w1_ref[...], preferred_element_type=jnp.float32)
        + p_ref[r_b1:r_b1 + 1, :])                                   # [tb, 128]

    # MXU push 2: all K head logits AND all K flow log-densities at once.
    cat = jnp.concatenate([z, z * z], axis=-1)                       # [tb, 256]
    head = (jnp.dot(cat, p_ref[0:2 * LANES, :],
                    preferred_element_type=jnp.float32)
            + p_ref[r_bh:r_bh + 1, :])                               # [tb, 128]
    # head lanes [0, K*C)        : logits of member k at [k*C,(k+1)*C)
    # head lanes [K*C, K*C+K)    : flow log-prob of member k

    logp = head[:, kc:kc + K]                                        # [tb, K]
    mp = jnp.max(logp, axis=-1, keepdims=True)                       # [tb, 1]
    wexp = jnp.exp(logp - mp)            # evidence softmax numerators (budget cancels)
    wsum = jnp.sum(wexp, axis=-1, keepdims=True)

    # log_prob = logsumexp_k(log_prob_k) - log(K)
    log_prob = mp + jnp.log(wsum) - log_k                            # [tb, 1]

    # mixture_posterior_update + Dirichlet prior update, algebraically folded:
    #   alpha = alpha0 + exp(mev) * sum_k softmax(logits_k) * exp(logev_k - mev)
    # with mev = mp + budget and logev_k - mev = logp_k - mp.
    acc = None
    for k in range(K):                       # static unroll, K is tiny
        logits_k = head[:, k * C:(k + 1) * C]
        m = jnp.max(logits_k, axis=-1, keepdims=True)
        e = jnp.exp(logits_k - m)
        suff_k = e / jnp.sum(e, axis=-1, keepdims=True)
        term = suff_k * wexp[:, k:k + 1]
        acc = term if acc is None else acc + term
    # TODO(synk): exp(mp + budget) overflows f32 once 0.5*H*log(4*pi) + max log_prob
    # exceeds ~88 (H ~ 100+); keep in log space / clamp before production sizes.
    alpha = p_ref[r_a0:r_a0 + 1, :C] + acc * jnp.exp(mp + log_budget)

    # Single lane-dense [tb, 128] writeback: alpha in lanes [0,C), log_prob in
    # lane C, zeros elsewhere -> one unmasked-vst output DMA.
    tail = jnp.zeros((tb, LANES - C - 1), jnp.float32)
    out_ref[...] = jnp.concatenate([alpha, log_prob, tail], axis=-1)


@functools.partial(jax.jit, static_argnames=("K", "H", "C"))
def natpe_forward(x, w1p, params, *, K, H, C):
    """Fused NatPE forward. Returns (posterior_alpha [B, C], log_prob [B, 1])."""
    B, Din = x.shape
    TB = B if B <= 128 else 128  # batch tile; weights stay resident across tiles
    kernel = functools.partial(_natpe_kernel, K=K, H=H, C=C)
    out = pl.pallas_call(
        kernel,
        grid=(pl.cdiv(B, TB),),
        in_specs=[
            pl.BlockSpec((TB, Din), lambda i: (i, 0)),        # batch tile of x
            pl.BlockSpec(w1p.shape, lambda i: (0, 0)),        # encoder weight slab
            pl.BlockSpec(params.shape, lambda i: (0, 0)),     # packed parameter slab
        ],
        out_specs=pl.BlockSpec((TB, LANES), lambda i: (i, 0)),
        out_shape=jax.ShapeDtypeStruct((B, LANES), jnp.float32),
        compiler_params=pltpu.CompilerParams(
            dimension_semantics=("parallel",)),   # shards batch across v7x's 2 TCs
    )(x, w1p, params)
    # TODO(synk): the torch module returns a Posterior *object*; here the posterior
    # is represented by its Dirichlet concentration `alpha`.
    return out[:, :C], out[:, C:C + 1]


def natpe_reference(x, w1, b1, w2, b2, prior_alpha):
    """Pure-JAX reference for correctness checking."""
    K, _, H = w1.shape
    log_budget = 0.5 * H * math.log(4.0 * math.pi)
    z = jnp.tanh(jnp.einsum("bd,kdh->kbh", x, w1) + b1)
    logits = jnp.einsum("kbh,khc->kbc", z, w2) + b2
    suff = jax.nn.softmax(logits, axis=-1)
    logp = -0.5 * jnp.sum(z * z, axis=-1, keepdims=True) - 0.5 * H * LOG_2PI
    logev = logp + log_budget
    log_ev_total = jax.scipy.special.logsumexp(logev, axis=0)
    weights = jax.nn.softmax(logev, axis=0)
    combined = jnp.sum(suff * weights, axis=0)
    alpha = prior_alpha + combined * jnp.exp(log_ev_total)
    log_prob = jax.scipy.special.logsumexp(logp, axis=0) - math.log(K)
    return alpha, log_prob


if __name__ == "__main__":
    B, Din, H, C, K = 8, 32, 32, 4, 3

    key = jax.random.PRNGKey(0)
    kx, k1, k2, k3, k4 = jax.random.split(key, 5)
    x = jax.random.normal(kx, (B, Din), dtype=jnp.float32)
    w1 = jax.random.normal(k1, (K, Din, H), dtype=jnp.float32) / math.sqrt(Din)
    b1 = jax.random.normal(k2, (K, 1, H), dtype=jnp.float32) * 0.1
    w2 = jax.random.normal(k3, (K, H, C), dtype=jnp.float32) / math.sqrt(H)
    b2 = jax.random.normal(k4, (K, 1, C), dtype=jnp.float32) * 0.1
    prior_alpha = jnp.ones((1, C), dtype=jnp.float32)  # uninformative Dirichlet prior

    # Parameter packing is hoisted out of the forward: runs once per weight set.
    w1p, params, (K_, H_, C_) = natpe_pack_params(w1, b1, w2, b2, prior_alpha)

    alpha, log_prob = natpe_forward(x, w1p, params, K=K_, H=H_, C=C_)
    jax.block_until_ready((alpha, log_prob))

    alpha_ref, log_prob_ref = natpe_reference(x, w1, b1, w2, b2, prior_alpha)
    np.testing.assert_allclose(np.asarray(alpha), np.asarray(alpha_ref),
                               rtol=1e-4, atol=1e-4)
    np.testing.assert_allclose(np.asarray(log_prob), np.asarray(log_prob_ref),
                               rtol=1e-4, atol=1e-4)

    print("KERNEL_OK")
</pallas_src>

<mosaic_0001>
module attributes {stable_mosaic.version = 11 : i64} {
  func.func @_natpe_kernel(%arg0: i32, %arg1: memref<8x32xf32, #tpu.memory_space<vmem>>, %arg2: memref<32x128xf32, #tpu.memory_space<vmem>>, %arg3: memref<264x128xf32, #tpu.memory_space<vmem>>, %arg4: memref<8x128xf32, #tpu.memory_space<vmem>>) attributes {dimension_semantics = [#tpu.dimension_semantics<parallel>], iteration_bounds = array<i64: 1>, scalar_prefetch = 0 : i64, scratch_operands = 0 : i64, tpu.core_type = #tpu.core_type<tc>, window_params = [{transform_indices = @transform_0, window_bounds = array<i64: 8, 32>}, {pipeline_mode = #tpu.pipeline_mode<synchronous>, transform_indices = @transform_1, window_bounds = array<i64: 32, 128>}, {pipeline_mode = #tpu.pipeline_mode<synchronous>, transform_indices = @transform_2, window_bounds = array<i64: 264, 128>}, {transform_indices = @transform_3, window_bounds = array<i64: 8, 128>}]} {
    %c0 = arith.constant 0 : index
    %c0_0 = arith.constant 0 : index
    %0 = vector.load %arg1[%c0, %c0_0] : memref<8x32xf32, #tpu.memory_space<vmem>>, vector<8x32xf32>
    %c0_1 = arith.constant 0 : index
    %c0_2 = arith.constant 0 : index
    %1 = vector.load %arg2[%c0_1, %c0_2] : memref<32x128xf32, #tpu.memory_space<vmem>>, vector<32x128xf32>
    %cst = arith.constant dense<0.000000e+00> : vector<8x128xf32>
    %2 = tpu.matmul %0, %1, %cst {dimension_numbers = #tpu.dot_dimension_numbers<[1], [0], [0], [1], [0, 0, 1, 1], [], []>} : vector<8x32xf32>, vector<32x128xf32>, vector<8x128xf32> -> vector<8x128xf32>
    %c256 = arith.constant 256 : index
    %c0_3 = arith.constant 0 : index
    %3 = vector.load %arg3[%c256, %c0_3] : memref<264x128xf32, #tpu.memory_space<vmem>>, vector<1x128xf32>
    %4 = vector.broadcast %3 : vector<1x128xf32> to vector<8x128xf32>
    %5 = arith.addf %2, %4 : vector<8x128xf32>
    %6 = math.tanh %5 : vector<8x128xf32>
    %7 = arith.mulf %6, %6 : vector<8x128xf32>
    %8 = tpu.concatenate %6, %7 in 1 : vector<8x128xf32>, vector<8x128xf32> -> vector<8x256xf32>
    %c0_4 = arith.constant 0 : index
    %c0_5 = arith.constant 0 : index
    %9 = vector.load %arg3[%c0_4, %c0_5] : memref<264x128xf32, #tpu.memory_space<vmem>>, vector<256x128xf32>
    %cst_6 = arith.constant dense<0.000000e+00> : vector<8x128xf32>
    %10 = tpu.matmul %8, %9, %cst_6 {dimension_numbers = #tpu.dot_dimension_numbers<[1], [0], [0], [1], [0, 0, 1, 1], [], []>} : vector<8x256xf32>, vector<256x128xf32>, vector<8x128xf32> -> vector<8x128xf32>
    %c257 = arith.constant 257 : index
    %c0_7 = arith.constant 0 : index
    %11 = vector.load %arg3[%c257, %c0_7] : memref<264x128xf32, #tpu.memory_space<vmem>>, vector<1x128xf32>
    %12 = vector.broadcast %11 : vector<1x128xf32> to vector<8x128xf32>
    %13 = arith.addf %10, %12 : vector<8x128xf32>
    %14 = vector.extract_strided_slice %13 {offsets = [0, 12], sizes = [8, 3], strides = [1, 1]} : vector<8x128xf32> to vector<8x3xf32>
    %cst_8 = arith.constant dense<0xFF800000> : vector<8xf32>
    %15 = vector.multi_reduction <maximumf>, %14, %cst_8 [1] : vector<8x3xf32> to vector<8xf32>
    %16 = vector.shape_cast %15 : vector<8xf32> to vector<8x1xf32>
    %17 = vector.broadcast %16 : vector<8x1xf32> to vector<8x3xf32>
    %18 = arith.subf %14, %17 : vector<8x3xf32>
    %19 = math.exp %18 : vector<8x3xf32>
    %cst_9 = arith.constant dense<0.000000e+00> : vector<8xf32>
    %20 = vector.multi_reduction <add>, %19, %cst_9 [1] : vector<8x3xf32> to vector<8xf32>
    %21 = vector.shape_cast %20 : vector<8xf32> to vector<8x1xf32>
    %22 = math.log %21 : vector<8x1xf32>
    %23 = arith.addf %16, %22 : vector<8x1xf32>
    %cst_10 = arith.constant 1.09861231 : f32
    %24 = vector.broadcast %cst_10 : f32 to vector<8x1xf32>
    %25 = arith.subf %23, %24 : vector<8x1xf32>
    %26 = vector.extract_strided_slice %13 {offsets = [0, 0], sizes = [8, 4], strides = [1, 1]} : vector<8x128xf32> to vector<8x4xf32>
    %cst_11 = arith.constant dense<0xFF800000> : vector<8xf32>
    %27 = vector.multi_reduction <maximumf>, %26, %cst_11 [1] : vector<8x4xf32> to vector<8xf32>
    %28 = vector.shape_cast %27 : vector<8xf32> to vector<8x1xf32>
    %29 = vector.broadcast %28 : vector<8x1xf32> to vector<8x4xf32>
    %30 = arith.subf %26, %29 : vector<8x4xf32>
    %31 = math.exp %30 : vector<8x4xf32>
    %cst_12 = arith.constant dense<0.000000e+00> : vector<8xf32>
    %32 = vector.multi_reduction <add>, %31, %cst_12 [1] : vector<8x4xf32> to vector<8xf32>
    %33 = vector.shape_cast %32 : vector<8xf32> to vector<8x1xf32>
    %34 = vector.broadcast %33 : vector<8x1xf32> to vector<8x4xf32>
    %35 = arith.divf %31, %34 : vector<8x4xf32>
    %36 = vector.extract_strided_slice %19 {offsets = [0, 0], sizes = [8, 1], strides = [1, 1]} : vector<8x3xf32> to vector<8x1xf32>
    %37 = vector.broadcast %36 : vector<8x1xf32> to vector<8x4xf32>
    %38 = arith.mulf %35, %37 : vector<8x4xf32>
    %39 = vector.extract_strided_slice %13 {offsets = [0, 4], sizes = [8, 4], strides = [1, 1]} : vector<8x128xf32> to vector<8x4xf32>
    %cst_13 = arith.constant dense<0xFF800000> : vector<8xf32>
    %40 = vector.multi_reduction <maximumf>, %39, %cst_13 [1] : vector<8x4xf32> to vector<8xf32>
    %41 = vector.shape_cast %40 : vector<8xf32> to vector<8x1xf32>
    %42 = vector.broadcast %41 : vector<8x1xf32> to vector<8x4xf32>
    %43 = arith.subf %39, %42 : vector<8x4xf32>
    %44 = math.exp %43 : vector<8x4xf32>
    %cst_14 = arith.constant dense<0.000000e+00> : vector<8xf32>
    %45 = vector.multi_reduction <add>, %44, %cst_14 [1] : vector<8x4xf32> to vector<8xf32>
    %46 = vector.shape_cast %45 : vector<8xf32> to vector<8x1xf32>
    %47 = vector.broadcast %46 : vector<8x1xf32> to vector<8x4xf32>
    %48 = arith.divf %44, %47 : vector<8x4xf32>
    %49 = vector.extract_strided_slice %19 {offsets = [0, 1], sizes = [8, 1], strides = [1, 1]} : vector<8x3xf32> to vector<8x1xf32>
    %50 = vector.broadcast %49 : vector<8x1xf32> to vector<8x4xf32>
    %51 = arith.mulf %48, %50 : vector<8x4xf32>
    %52 = arith.addf %38, %51 : vector<8x4xf32>
    %53 = vector.extract_strided_slice %13 {offsets = [0, 8], sizes = [8, 4], strides = [1, 1]} : vector<8x128xf32> to vector<8x4xf32>
    %cst_15 = arith.constant dense<0xFF800000> : vector<8xf32>
    %54 = vector.multi_reduction <maximumf>, %53, %cst_15 [1] : vector<8x4xf32> to vector<8xf32>
    %55 = vector.shape_cast %54 : vector<8xf32> to vector<8x1xf32>
    %56 = vector.broadcast %55 : vector<8x1xf32> to vector<8x4xf32>
    %57 = arith.subf %53, %56 : vector<8x4xf32>
    %58 = math.exp %57 : vector<8x4xf32>
    %cst_16 = arith.constant dense<0.000000e+00> : vector<8xf32>
    %59 = vector.multi_reduction <add>, %58, %cst_16 [1] : vector<8x4xf32> to vector<8xf32>
    %60 = vector.shape_cast %59 : vector<8xf32> to vector<8x1xf32>
    %61 = vector.broadcast %60 : vector<8x1xf32> to vector<8x4xf32>
    %62 = arith.divf %58, %61 : vector<8x4xf32>
    %63 = vector.extract_strided_slice %19 {offsets = [0, 2], sizes = [8, 1], strides = [1, 1]} : vector<8x3xf32> to vector<8x1xf32>
    %64 = vector.broadcast %63 : vector<8x1xf32> to vector<8x4xf32>
    %65 = arith.mulf %62, %64 : vector<8x4xf32>
    %66 = arith.addf %52, %65 : vector<8x4xf32>
    %c258 = arith.constant 258 : index
    %c0_17 = arith.constant 0 : index
    %67 = vector.load %arg3[%c258, %c0_17] : memref<264x128xf32, #tpu.memory_space<vmem>>, vector<1x4xf32>
    %cst_18 = arith.constant 40.4963875 : f32
    %68 = vector.broadcast %cst_18 : f32 to vector<8x1xf32>
    %69 = arith.addf %16, %68 : vector<8x1xf32>
    %70 = math.exp %69 : vector<8x1xf32>
    %71 = vector.broadcast %70 : vector<8x1xf32> to vector<8x4xf32>
    %72 = arith.mulf %66, %71 : vector<8x4xf32>
    %73 = vector.broadcast %67 : vector<1x4xf32> to vector<8x4xf32>
    %74 = arith.addf %73, %72 : vector<8x4xf32>
    %cst_19 = arith.constant 0.000000e+00 : f32
    %75 = vector.broadcast %cst_19 : f32 to vector<8x123xf32>
    %76 = tpu.concatenate %74, %25, %75 in 1 : vector<8x4xf32>, vector<8x1xf32>, vector<8x123xf32> -> vector<8x128xf32>
    %c0_20 = arith.constant 0 : index
    %c0_21 = arith.constant 0 : index
    %77 = vector.load %arg4[%c0_20, %c0_21] : memref<8x128xf32, #tpu.memory_space<vmem>>, vector<8x128xf32>
    tpu.vector_store %arg4[%c0_20, %c0_21], %76 {strides = array<i32>} : memref<8x128xf32, #tpu.memory_space<vmem>>, vector<8x128xf32>,
    return
  }
  func.func @transform_0(%arg0: i32) -> (i32, i32) {
    %c0_i32 = arith.constant 0 : i32
    %c0_i32_0 = arith.constant 0 : i32
    return %arg0, %c0_i32 : i32, i32
  }
  func.func @transform_1(%arg0: i32) -> (i32, i32) {
    %c0_i32 = arith.constant 0 : i32
    %c0_i32_0 = arith.constant 0 : i32
    %c0_i32_1 = arith.constant 0 : i32
    return %c0_i32, %c0_i32_0 : i32, i32
  }
  func.func @transform_2(%arg0: i32) -> (i32, i32) {
    %c0_i32 = arith.constant 0 : i32
    %c0_i32_0 = arith.constant 0 : i32
    %c0_i32_1 = arith.constant 0 : i32
    return %c0_i32, %c0_i32_0 : i32, i32
  }
  func.func @transform_3(%arg0: i32) -> (i32, i32) {
    %c0_i32 = arith.constant 0 : i32
    %c0_i32_0 = arith.constant 0 : i32
    return %arg0, %c0_i32 : i32, i32
  }
}

</mosaic_0001>

<llo_original>
// kernel: natpe_forward.1
$region0: #{natpe_forward.1}
  #allocation0 [shape = 'u32[]', space=smem, size = 0x4, offset = 0x4, fixed_abs, tag = 'smem constant byte address 0x4 - core index']
  #allocation1 [shape = 'u32[72,128]{1,0:T(1,128)}', space=vmem, size = 0x9000, scoped, tag = 'internal scratch']
  %s0 = inlined_call_operand.hbm [shape: f32[8,32], index: 0, kind: input, shape index: {}]
  %s1 = inlined_call_operand.hbm [shape: f32[32,128], index: 1, kind: input, shape index: {}]
  %s2 = inlined_call_operand.hbm [shape: f32[264,128], index: 2, kind: input, shape index: {}]
  %s3 = inlined_call_operand.vmem [shape: f32[8,128], index: 3, kind: output, shape index: {}]
  %s4 = sld [smem:[#allocation0]]
  $region34: #{natpe_forward.1} parent=0
    _
  %s6 = ssub.s32 1, %s4
  %s7 = scalar_select 0, %s6, %s4
  $region1: #{natpe_forward.1} parent=0
    #allocation2 [shape = 'u8[4096]{0}', space=vmem, size = 0x1000, scoped, tag = 'input window, operand 0, single buffered']
    #allocation3 [shape = 's32[1]{0}', space=sflag, size = 0x4, scoped, tag = 'scoped memory for natpe_forward.1']
    #allocation4 [shape = 'u8[16384]{0}', space=vmem, size = 0x4000, scoped, tag = 'input window, operand 1, single buffered']
    #allocation5 [shape = 's32[1]{0}', space=sflag, size = 0x4, scoped, tag = 'scoped memory for natpe_forward.1']
    #allocation6 [shape = 'u8[135168]{0}', space=vmem, size = 0x21000, scoped, tag = 'input window, operand 2, single buffered']
    %8 = vsyncpa [#allocation3], 0
    %9 = vsyncpa [#allocation5], 0
    // Predicated region
    $region2: #{natpe_forward.1} parent=1 // pred_check
      _
    $region3: #{natpe_forward.1} parent=1 // pred_check_branch
      %11 = sbr.rel (0) target = $region5
    $region4: #{natpe_forward.1} parent=1 // pred_region
      %13 = vsyncadd [#allocation3], 0
      %s15 = sshll.u32 %s0, 4
      %s16 = int_to_ptr.hbm [resolvable:$true] %s15
      %s17 = sshll.u32 [#allocation2], 4
      %s18 = int_to_ptr.vmem [resolvable:$true] %s17
      %20 = dma.hbm_to_vmem [thread:$0]  %s16, 128, %s18, [#allocation3]
    $region5: #{natpe_forward.1} parent=1 // pred_fallthru
      _
    // Predicated region
    $region6: #{natpe_forward.1} parent=1 // pred_check
      _
    $region7: #{natpe_forward.1} parent=1 // pred_check_branch
      %22 = sbr.rel (0) target = $region9
    $region8: #{natpe_forward.1} parent=1 // pred_region
      %24 = vsyncadd [#allocation5], 0
      %s25 = sshll.u32 %s1, 4
      %s26 = int_to_ptr.hbm [resolvable:$true] %s25
      %s27 = sshll.u32 [#allocation4], 4
      %s28 = int_to_ptr.vmem [resolvable:$true] %s27
      %33 = dma.hbm_to_vmem [thread:$0]  %s26, 512, %s28, [#allocation5], 128, 128, 8
    $region9: #{natpe_forward.1} parent=1 // pred_fallthru
      _
    // Predicated region
    $region10: #{natpe_forward.1} parent=1 // pred_check
      _
    $region11: #{natpe_forward.1} parent=1 // pred_check_branch
      %35 = sbr.rel (0) target = $region13
    $region12: #{natpe_forward.1} parent=1 // pred_region
      %37 = vsyncadd [#allocation5], 0
      %s38 = sshll.u32 %s2, 4
      %s39 = int_to_ptr.hbm [resolvable:$true] %s38
      %s40 = sshll.u32 [#allocation6], 4
      %s41 = int_to_ptr.vmem [resolvable:$true] %s40
      %46 = dma.hbm_to_vmem [thread:$0]  %s39, 4224, %s41, [#allocation5], 128, 128, 8
    $region13: #{natpe_forward.1} parent=1 // pred_fallthru
      _
    // Predicated region
    $region14: #{natpe_forward.1} parent=1 // pred_check
      _
    $region15: #{natpe_forward.1} parent=1 // pred_check_branch
      %48 = sbr.rel (0) target = $region17
    $region16: #{natpe_forward.1} parent=1 // pred_region
      %50 = dma.done [#allocation3], 128
    $region17: #{natpe_forward.1} parent=1 // pred_fallthru
      _
    // Predicated region
    $region18: #{natpe_forward.1} parent=1 // pred_check
      _
    $region19: #{natpe_forward.1} parent=1 // pred_check_branch
      %52 = sbr.rel (0) target = $region21
    $region20: #{natpe_forward.1} parent=1 // pred_region
      %54 = dma.done [#allocation5], 512
    $region21: #{natpe_forward.1} parent=1 // pred_fallthru
      _
    // Predicated region
    $region22: #{natpe_forward.1} parent=1 // pred_check
      _
    $region23: #{natpe_forward.1} parent=1 // pred_check_branch
      %56 = sbr.rel (0) target = $region25
    $region24: #{natpe_forward.1} parent=1 // pred_region
      %58 = dma.done [#allocation5], 4224
    $region25: #{natpe_forward.1} parent=1 // pred_fallthru
      _
    %v59 = vld [vmem:[#allocation2] sm:$0xff]
    %v60 = vld [vmem:[#allocation4] sm:$0xff]
    %v61 = vld [vmem:[#allocation4 + $0x8] sm:$0xff]
    %v62 = vld [vmem:[#allocation4 + $0x10] sm:$0xff]
    %v63 = vld [vmem:[#allocation4 + $0x18] sm:$0xff]
    %v64 = vld [vmem:[#allocation6 + $0x100] sm:$0x1]
    %v65 = vperm.slane %v64, 0
    %vm66 = vcmask 261120
    %v68 = vsel %vm66, %v59, 0
    %70 = vmatpush.msra.mxu0 0.0
    %71 = vmatpush.msra.mxu0 0.0
    %72 = vmatpush.msra.mxu0 0.0
    %73 = vmatpush.msra.mxu0 0.0
    %74 = vmatpush.msra.mxu0 0.0
    %75 = vmatpush.msra.mxu0 0.0
    %76 = vmatpush.msra.mxu0 0.0
    %77 = vmatpush.msra.mxu0 0.0
    %78 = vmatpush.msra.mxu0 0.0
    %79 = vmatpush.msra.mxu0 0.0
    %80 = vmatpush.msra.mxu0 0.0
    %81 = vmatpush.msra.mxu0 0.0
    %82 = vmatpush.msra.mxu0 %v63
    %83 = vmatpush.msra.mxu0 %v62
    %84 = vmatpush.msra.mxu0 %v61
    %85 = vmatpush.msra.mxu0 %v60
    %86 = vmatmul.f32.gmra.mxu0 %v68
    %v87 = vpop.f32.mrf.mxu0
    %v88 = vadd.f32 %v65, %v87
    %89 = vdwg.mxu0
    %v90 = vtanh.pop %v88
    %v91 = vmul.f32 %v90, %v90
    %v92 = vld [vmem:[#allocation6] sm:$0xff]
    %v93 = vld [vmem:[#allocation6 + $0x8] sm:$0xff]
    %v94 = vld [vmem:[#allocation6 + $0x10] sm:$0xff]
    %v95 = vld [vmem:[#allocation6 + $0x18] sm:$0xff]
    %v96 = vld [vmem:[#allocation6 + $0x20] sm:$0xff]
    %v97 = vld [vmem:[#allocation6 + $0x28] sm:$0xff]
    %v98 = vld [vmem:[#allocation6 + $0x30] sm:$0xff]
    %v99 = vld [vmem:[#allocation6 + $0x38] sm:$0xff]
    %v100 = vld [vmem:[#allocation6 + $0x40] sm:$0xff]
    %v101 = vld [vmem:[#allocation6 + $0x48] sm:$0xff]
    %v102 = vld [vmem:[#allocation6 + $0x50] sm:$0xff]
    %v103 = vld [vmem:[#allocation6 + $0x58] sm:$0xff]
    %v104 = vld [vmem:[#allocation6 + $0x60] sm:$0xff]
    %v105 = vld [vmem:[#allocation6 + $0x68] sm:$0xff]
    %v106 = vld [vmem:[#allocation6 + $0x70] sm:$0xff]
    %v107 = vld [vmem:[#allocation6 + $0x78] sm:$0xff]
    %v108 = vld [vmem:[#allocation6 + $0x80] sm:$0xff]
    %v109 = vld [vmem:[#allocation6 + $0x88] sm:$0xff]
    %v110 = vld [vmem:[#allocation6 + $0x90] sm:$0xff]
    %v111 = vld [vmem:[#allocation6 + $0x98] sm:$0xff]
    %v112 = vld [vmem:[#allocation6 + $0xa0] sm:$0xff]
    %v113 = vld [vmem:[#allocation6 + $0xa8] sm:$0xff]
    %v114 = vld [vmem:[#allocation6 + $0xb0] sm:$0xff]
    %v115 = vld [vmem:[#allocation6 + $0xb8] sm:$0xff]
    %v116 = vld [vmem:[#allocation6 + $0xc0] sm:$0xff]
    %v117 = vld [vmem:[#allocation6 + $0xc8] sm:$0xff]
    %v118 = vld [vmem:[#allocation6 + $0xd0] sm:$0xff]
    %v119 = vld [vmem:[#allocation6 + $0xd8] sm:$0xff]
    %v120 = vld [vmem:[#allocation6 + $0xe0] sm:$0xff]
    %v121 = vld [vmem:[#allocation6 + $0xe8] sm:$0xff]
    %v122 = vld [vmem:[#allocation6 + $0xf0] sm:$0xff]
    %v123 = vld [vmem:[#allocation6 + $0xf8] sm:$0xff]
    %v124 = vld [vmem:[#allocation6 + $0x101] sm:$0x1]
    %v125 = vperm.slane %v124, 0
    %126 = vmatpush.msra.mxu0 %v107
    %127 = vmatpush.msra.mxu0 %v106
    %128 = vmatpush.msra.mxu0 %v105
    %129 = vmatpush.msra.mxu0 %v104
    %130 = vmatpush.msra.mxu0 %v103
    %131 = vmatpush.msra.mxu0 %v102
    %132 = vmatpush.msra.mxu0 %v101
    %133 = vmatpush.msra.mxu0 %v100
    %134 = vmatpush.msra.mxu0 %v99
    %135 = vmatpush.msra.mxu0 %v98
    %136 = vmatpush.msra.mxu0 %v97
    %137 = vmatpush.msra.mxu0 %v96
    %138 = vmatpush.msra.mxu0 %v95
    %139 = vmatpush.msra.mxu0 %v94
    %140 = vmatpush.msra.mxu0 %v93
    %141 = vmatpush.msra.mxu0 %v92
    %142 = vmatmul.f32.gmra.mxu0 %v90
    %v143 = vpop.f32.mrf.mxu0
    %v144 = vadd.f32 %v125, %v143
    %145 = vdwg.mxu0
    %146 = vmatpush.msra.mxu0 %v123
    %147 = vmatpush.msra.mxu0 %v122
    %148 = vmatpush.msra.mxu0 %v121
    %149 = vmatpush.msra.mxu0 %v120
    %150 = vmatpush.msra.mxu0 %v119
    %151 = vmatpush.msra.mxu0 %v118
    %152 = vmatpush.msra.mxu0 %v117
    %153 = vmatpush.msra.mxu0 %v116
    %154 = vmatpush.msra.mxu0 %v115
    %155 = vmatpush.msra.mxu0 %v114
    %156 = vmatpush.msra.mxu0 %v113
    %157 = vmatpush.msra.mxu0 %v112
    %158 = vmatpush.msra.mxu0 %v111
    %159 = vmatpush.msra.mxu0 %v110
    %160 = vmatpush.msra.mxu0 %v109
    %161 = vmatpush.msra.mxu0 %v108
    %162 = vmatmul.f32.gmra.mxu0 %v91
    %v163 = vpop.f32.mrf.mxu0
    %v164 = vadd.f32 %v144, %v163
    %165 = vdwg.mxu0
    %vm166 = vcmask 121952
    %v167 = vsel %vm166, %v164, -inf
    %168 = vmax.xlane.f32.xlu0 %v167
    %v169 = vpop.xlane.xlu0 %168
    %v170 = vsub.f32 %v164, %v169
    %v171 = vmul.f32 %v170, 1.442695
    %v172 = vpow.pop %v171
    %174 = vrot.lane.b32.xlu0 %v172, 116
    %v175 = vpop.permute.xlu0 %174
    %vm177 = vcmask 23552
    %v178 = vsel %vm177, %v175, 0.0
    %179 = vadd.xlane.f32.xlu0 %v178
    %v180 = vpop.xlane.xlu0 %179
    %v181 = vlog2.pop %v180
    %v182 = vmul.f32 %v181, 0.6931472
    %v183 = vadd.f32 %v169, %v182
    %v184 = vsub.f32 %v183, 1.0986123
    %vm185 = vcmask 31744
    %v186 = vsel %vm185, %v164, -inf
    %187 = vmax.xlane.f32.xlu0 %v186
    %v188 = vpop.xlane.xlu0 %187
    %v189 = vsub.f32 %v164, %v188
    %v190 = vmul.f32 %v189, 1.442695
    %v191 = vpow.pop %v190
    %v192 = vsel %vm185, %v191, 0.0
    %193 = vadd.xlane.f32.xlu0 %v192
    %v194 = vpop.xlane.xlu0 %193
    %v195 = vrcp.pop %v194
    %v196 = vmul.f32 %v194, %v195
    %v197 = vsub.f32 1.0, %v196
    %v198 = vmul.f32 %v195, %v197
    %v199 = vadd.f32 %v195, %v198
    %vm200 = vweird.f32 %v194
    %vm201 = vweird.f32 %v195
    %vm202 = vmor %vm200, %vm201
    %v203 = vsel %vm202, %v195, %v199
    %v204 = vand.u32 2147483647, %v194
    %vm205 = vcmp.eq.f32.partialorder %v204, 8.507059e+37
    %v206 = vand.u32 %v194, 2147483648
    %v207 = vor.u32 1.1754944e-38, %v206
    %v208 = vsel %vm205, %v207, %v203
    %v209 = vmul.f32 %v191, %v208
    %210 = vset.pattern.permute.xlu0 12
    %211 = vperm.xlu0 %210, %v172
    %v212 = vpop.permute.xlu0 %211
    %v214 = vmul.f32 %v209, %v212
    %vm215 = vcmask 64544
    %v216 = vsel %vm215, %v164, -inf
    %217 = vmax.xlane.f32.xlu0 %v216
    %v218 = vpop.xlane.xlu0 %217
    %v219 = vsub.f32 %v164, %v218
    %v220 = vmul.f32 %v219, 1.442695
    %v221 = vpow.pop %v220
    %223 = vrot.lane.b32.xlu0 %v221, 124
    %v224 = vpop.permute.xlu0 %223
    %v226 = vsel %vm185, %v224, 0.0
    %227 = vadd.xlane.f32.xlu0 %v226
    %v228 = vpop.xlane.xlu0 %227
    %v229 = vrcp.pop %v228
    %v230 = vmul.f32 %v228, %v229
    %v231 = vsub.f32 1.0, %v230
    %v232 = vmul.f32 %v229, %v231
    %v233 = vadd.f32 %v229, %v232
    %vm234 = vweird.f32 %v228
    %vm235 = vweird.f32 %v229
    %vm236 = vmor %vm234, %vm235
    %v237 = vsel %vm236, %v229, %v233
    %v238 = vand.u32 2147483647, %v228
    %vm239 = vcmp.eq.f32.partialorder %v238, 8.507059e+37
    %v240 = vand.u32 %v228, 2147483648
    %v241 = vor.u32 1.1754944e-38, %v240
    %v242 = vsel %vm239, %v241, %v237
    %v243 = vmul.f32 %v221, %v242
    %244 = vset.pattern.permute.xlu0 13
    %245 = vperm.xlu0 %244, %v172
    %v246 = vpop.permute.xlu0 %245
    %v248 = vmul.f32 %v243, %v246
    %250 = vrot.lane.b32.xlu0 %v248, 124
    %v251 = vpop.permute.xlu0 %250
    %v253 = vadd.f32 %v214, %v251
    %vm254 = vcmask 97344
    %v255 = vsel %vm254, %v164, -inf
    %256 = vmax.xlane.f32.xlu0 %v255
    %v257 = vpop.xlane.xlu0 %256
    %v258 = vsub.f32 %v164, %v257
    %v259 = vmul.f32 %v258, 1.442695
    %v260 = vpow.pop %v259
    %262 = vrot.lane.b32.xlu0 %v260, 120
    %v263 = vpop.permute.xlu0 %262
    %v265 = vsel %vm185, %v263, 0.0
    %266 = vadd.xlane.f32.xlu0 %v265
    %v267 = vpop.xlane.xlu0 %266
    %v268 = vrcp.pop %v267
    %v269 = vmul.f32 %v267, %v268
    %v270 = vsub.f32 1.0, %v269
    %v271 = vmul.f32 %v268, %v270
    %v272 = vadd.f32 %v268, %v271
    %vm273 = vweird.f32 %v267
    %vm274 = vweird.f32 %v268
    %vm275 = vmor %vm273, %vm274
    %v276 = vsel %vm275, %v268, %v272
    %v277 = vand.u32 2147483647, %v267
    %vm278 = vcmp.eq.f32.partialorder %v277, 8.507059e+37
    %v279 = vand.u32 %v267, 2147483648
    %v280 = vor.u32 1.1754944e-38, %v279
    %v281 = vsel %vm278, %v280, %v276
    %v282 = vmul.f32 %v260, %v281
    %283 = vset.pattern.permute.xlu0 14
    %284 = vperm.xlu0 %283, %v172
    %v285 = vpop.permute.xlu0 %284
    %v287 = vmul.f32 %v282, %v285
    %289 = vrot.lane.b32.xlu0 %v287, 120
    %v290 = vpop.permute.xlu0 %289
    %v292 = vadd.f32 %v253, %v290
    %v293 = vld [vmem:[#allocation6 + $0x102] sm:$0x1]
    %v294 = vadd.f32 %v169, 40.496387
    %v295 = vmul.f32 %v294, 1.442695
    %v296 = vpow.pop %v295
    %v297 = vmul.f32 %v292, %v296
    %v298 = vperm.slane %v293, 0
    %v299 = vadd.f32 %v298, %v297
    %v300 = vsel %vm185, %v299, %v184
    %vm301 = vcmask 39936
    %v302 = vsel %vm301, %v300, 0.0
    %303 = vst [vmem:[%s3] sm:$0xff] %v302
    // Predicated region
    $region26: #{natpe_forward.1} parent=1 // pred_check
      _
    $region27: #{natpe_forward.1} parent=1 // pred_check_branch
      %305 = sbr.rel (0) target = $region29
    $region28: #{natpe_forward.1} parent=1 // pred_region
      _
    $region29: #{natpe_forward.1} parent=1 // pred_fallthru
      _
    // Predicated region
    $region30: #{natpe_forward.1} parent=1 // pred_check
      _
    $region31: #{natpe_forward.1} parent=1 // pred_check_branch
      %307 = sbr.rel (0) target = $region33
    $region32: #{natpe_forward.1} parent=1 // pred_region
      _
    $region33: #{natpe_forward.1} parent=1 // pred_fallthru
      _
    %308 = vsyncpa [#allocation3], 1
    %309 = vsyncpa [#allocation5], 1

</llo_original>
